<compile_context>
chip_gen: v5e
topology: v5e:2x2
jax: 0.10.0
libtpu: 0.0.40
codegen_flags: <defaults>
</compile_context>

<pallas_src>
import functools

import jax
import jax.numpy as jnp
from jax import lax
from jax.experimental import pallas as pl
from jax.experimental.pallas import tpu as pltpu

_LANES = 128
_NEG_INF = float("-inf")


def _round_up(x: int, m: int) -> int:
    return ((x + m - 1) // m) * m


def _supcon_kernel(e_row_ref, e_col_ref, lab_row_ref, lab_col_ref, npos_ref,
                   out_ref, m_sc, l_sc, s_sc, *, inv_t, n, tm, tn, mask_cols):
    i = pl.program_id(0)          # anchor-row tile     (parallel)
    j = pl.program_id(1)          # contrast-column tile (reduction, last)

    @pl.when(j == 0)
    def _init():
        m_sc[...] = jnp.full_like(m_sc, _NEG_INF)
        l_sc[...] = jnp.zeros_like(l_sc)
        s_sc[...] = jnp.zeros_like(s_sc)

    # (TM, TN) similarities: contract the feature axis of both operands (no
    # transposed copy), accumulate in f32 on the MXU, then apply 1/T.
    sim = lax.dot_general(e_row_ref[...], e_col_ref[...],
                          (((1,), (1,)), ((), ())),
                          preferred_element_type=jnp.float32) * inv_t

    # Thin iotas only; broadcasting to (TM, TN) happens inside the compares.
    rows = i * tm + lax.broadcasted_iota(jnp.int32, (tm, 1), 0)
    cols = j * tn + lax.broadcasted_iota(jnp.int32, (1, tn), 1)
    keep = rows != cols                       # denominator mask (no self-pair)
    if mask_cols:                             # static: only when columns are padded
        keep = keep & (cols < n)

    # Fused mask: one select feeds both the running max and the exp
    # (exp(-inf) == 0 provides the denominator masking for free).
    sim_keep = jnp.where(keep, sim, _NEG_INF)
    m_new = jnp.maximum(m_sc[...], jnp.max(sim_keep, axis=1, keepdims=True))
    alpha = jnp.exp(m_sc[...] - m_new)        # exp(-inf - finite) = 0 on step 0
    p_exp = jnp.exp(sim_keep - m_new)
    l_sc[...] = alpha * l_sc[...] + jnp.sum(p_exp, axis=1, keepdims=True)
    m_sc[...] = m_new

    # Exact sum of positive similarities (the max shift cancels analytically,
    # so no rescaling of this accumulator is ever needed).
    pos = keep & (lab_row_ref[...] == lab_col_ref[...])
    s_sc[...] += jnp.sum(jnp.where(pos, sim, 0.0), axis=1, keepdims=True)

    @pl.when(j == pl.num_programs(1) - 1)
    def _finalize():
        # sum_{p in pos} log_prob = sum_pos(sim) - n_pos * (m + log(clamp(l)))
        n_pos = npos_ref[...]
        log_denom = m_sc[...] + jnp.log(jnp.maximum(l_sc[...], 1e-12))
        sum_log_prob = s_sc[...] - n_pos * log_denom
        # Guard: rows with no positives (or the n == 1 degenerate) give exactly 0,
        # matching the PyTorch 0 / clamp(0, 1e-12) path, and never 0 * (-inf) = NaN.
        out_ref[...] = jnp.where(n_pos > 0.0,
                                 sum_log_prob / jnp.maximum(n_pos, 1.0),
                                 0.0)


def supcon_loss(embeddings: jax.Array, labels: jax.Array,
                temperature: float = 0.07, *, tn_max: int = 1024,
                use_bf16_matmul: bool = False) -> jax.Array:
    if temperature <= 0:
        raise ValueError("temperature must be > 0.")
    n, d = embeddings.shape
    d_pad = _round_up(d, _LANES)
    itemsize = jnp.dtype(embeddings.dtype).itemsize

    # ---- tile selection ---------------------------------------------------
    # Rows pad only to TM, columns only to a multiple of 128 lanes.
    n_cols_pad = _round_up(n, _LANES)
    if n >= 1024:
        tm = 256
    elif n > 128:
        tm = 128               # keeps >=2 row tiles (v7x TensorCore split) for n>128
    else:
        tm = _round_up(n, 8)
    if n_cols_pad <= tn_max:
        tn = n_cols_pad        # single column sweep when it fits the budget
    else:
        tn = max(c for c in (1024, 512, 384, 256, 128)
                 if c <= tn_max and n_cols_pad % c == 0)

    # Keep the per-step working set comfortably under the 16 MiB default scoped
    # VMEM of v5e (v6e/v7x have 32 MiB): 2x-buffered e tiles + a few f32 temporaries.
    budget = 10 * 1024 * 1024

    def _step_bytes(tm_, tn_):
        return (2 * tn_ * d_pad * itemsize + 2 * tm_ * d_pad * itemsize
                + 4 * tm_ * tn_ * 4)

    while tn > 128 and _step_bytes(tm, tn) > budget:
        tn = [c for c in (512, 384, 256, 128) if c < tn and n_cols_pad % c == 0][0]
    while tm > 8 and _step_bytes(tm, tn) > budget:
        tm = max(8, ((tm // 2) + 7) // 8 * 8)

    n_rows_pad = _round_up(n, tm)
    grid = (n_rows_pad // tm, n_cols_pad // tn)
    mask_cols = n_cols_pad != n

    # ---- padded operands ----------------------------------------------------
    emb = embeddings
    if use_bf16_matmul and emb.dtype == jnp.float32:
        # Optional v6e/v7x tuning: bf16 MXU operands (f32 accumulate). Off by
        # default so the result stays tight against the f32 reference.
        emb = emb.astype(jnp.bfloat16)
    emb_rows = jnp.pad(emb, ((0, n_rows_pad - n), (0, d_pad - d)))
    emb_cols = jnp.pad(emb, ((0, n_cols_pad - n), (0, d_pad - d)))

    lab = labels.astype(jnp.int32)
    lab_rows = jnp.pad(lab, (0, n_rows_pad - n)).reshape(n_rows_pad, 1)
    lab_cols = jnp.pad(lab, (0, n_cols_pad - n)).reshape(1, n_cols_pad)

    # Positive count per anchor depends only on the labels: compute it once here
    # (equal-label count minus self) instead of accumulating it inside the kernel.
    n_pos = (jnp.sum(lab[None, :] == lab[:, None], axis=1) - 1).astype(jnp.float32)
    n_pos = jnp.pad(n_pos, (0, n_rows_pad - n)).reshape(n_rows_pad, 1)

    kernel = functools.partial(
        _supcon_kernel, inv_t=1.0 / float(temperature), n=n, tm=tm, tn=tn,
        mask_cols=mask_cols)

    cost = pl.CostEstimate(
        flops=int(2 * n_rows_pad * n_cols_pad * d_pad),
        transcendentals=int(n_rows_pad * n_cols_pad),
        bytes_accessed=int(n_rows_pad * d_pad * itemsize
                           + grid[0] * n_cols_pad * d_pad * itemsize   # col re-streams
                           + grid[0] * (n_cols_pad + n_rows_pad) * 4   # labels
                           + n_rows_pad * 8))                          # n_pos + out

    mean_log_prob_pos = pl.pallas_call(
        kernel,
        out_shape=jax.ShapeDtypeStruct((n_rows_pad, 1), jnp.float32),
        grid_spec=pltpu.PrefetchScalarGridSpec(
            num_scalar_prefetch=0,
            grid=grid,
            in_specs=[
                pl.BlockSpec((tm, d_pad), lambda i, j: (i, 0)),   # anchor rows
                pl.BlockSpec((tn, d_pad), lambda i, j: (j, 0)),   # contrast columns
                pl.BlockSpec((tm, 1), lambda i, j: (i, 0)),       # anchor labels
                pl.BlockSpec((1, tn), lambda i, j: (0, j)),       # contrast labels
                pl.BlockSpec((tm, 1), lambda i, j: (i, 0)),       # positive counts
            ],
            out_specs=pl.BlockSpec((tm, 1), lambda i, j: (i, 0)),
            scratch_shapes=[pltpu.VMEM((tm, 1), jnp.float32)] * 3,   # m, l, s
        ),
        compiler_params=pltpu.CompilerParams(
            dimension_semantics=("parallel", "arbitrary")),
        cost_estimate=cost,
    )(emb_rows, emb_cols, lab_rows, lab_cols, n_pos)

    # Drop padded rows, take the mean, negate — matches the PyTorch forward.
    return -jnp.mean(mean_log_prob_pos[:n, 0])


def _supcon_loss_ref(embeddings, labels, temperature=0.07):
    # Pure-JAX reference mirroring the PyTorch forward exactly.
    e = embeddings.astype(jnp.float32)
    sim = jnp.matmul(e, e.T) / temperature
    logits = sim - jnp.max(sim, axis=1, keepdims=True)
    mask = (labels[None, :] == labels[:, None]).astype(jnp.float32)
    logits_mask = 1.0 - jnp.eye(sim.shape[0], dtype=jnp.float32)
    mask = mask * logits_mask
    exp_logits = jnp.exp(logits) * logits_mask
    log_prob = logits - jnp.log(jnp.clip(exp_logits.sum(1, keepdims=True), 1e-12))
    denom_pos = jnp.clip(mask.sum(1), 1e-12)
    mean_log_prob_pos = (mask * log_prob).sum(1) / denom_pos
    return -mean_log_prob_pos.mean()


if __name__ == "__main__":
    key = jax.random.PRNGKey(0)
    k1, k2, k3 = jax.random.split(key, 3)

    # Small case consistent with the module (batch=8, hidden=32).
    N, D = 8, 32
    emb = jax.random.normal(k1, (N, D), dtype=jnp.float32)
    emb = emb / jnp.linalg.norm(emb, axis=1, keepdims=True)
    labels = jnp.array([0, 1, 0, 1, 2, 2, 0, 1], dtype=jnp.int32)

    loss = jax.block_until_ready(supcon_loss(emb, labels, temperature=0.07))
    ref = _supcon_loss_ref(emb, labels, temperature=0.07)
    assert jnp.allclose(loss, ref, rtol=1e-4, atol=1e-4), (loss, ref)

    # Case exercising multiple row tiles, row+column padding masks and the
    # multi-step online reduction over column tiles (tn_max=128 forces 2 column
    # steps; n=200 -> rows pad to 256 with TM=128, columns pad to 256).
    N2, D2 = 200, 48
    emb2 = jax.random.normal(k2, (N2, D2), dtype=jnp.float32)
    emb2 = emb2 / jnp.linalg.norm(emb2, axis=1, keepdims=True)
    labels2 = jax.random.randint(k3, (N2,), 0, 7, dtype=jnp.int32)

    loss2 = jax.block_until_ready(
        supcon_loss(emb2, labels2, temperature=0.07, tn_max=128))
    ref2 = _supcon_loss_ref(emb2, labels2, temperature=0.07)
    assert jnp.allclose(loss2, ref2, rtol=5e-4, atol=5e-4), (loss2, ref2)

    print("KERNEL_OK")
</pallas_src>

<mosaic_0001>
module attributes {stable_mosaic.version = 11 : i64} {
  func.func @_supcon_kernel(%arg0: i32, %arg1: i32, %arg2: memref<8x128xf32, #tpu.memory_space<vmem>>, %arg3: memref<128x128xf32, #tpu.memory_space<vmem>>, %arg4: memref<8x1xi32, #tpu.memory_space<vmem>>, %arg5: memref<1x128xi32, #tpu.memory_space<vmem>>, %arg6: memref<8x1xf32, #tpu.memory_space<vmem>>, %arg7: memref<8x1xf32, #tpu.memory_space<vmem>>, %arg8: memref<8x1xf32, #tpu.memory_space<vmem>>, %arg9: memref<8x1xf32, #tpu.memory_space<vmem>>, %arg10: memref<8x1xf32, #tpu.memory_space<vmem>>) attributes {dimension_semantics = [#tpu.dimension_semantics<parallel>, #tpu.dimension_semantics<arbitrary>], iteration_bounds = array<i64: 1, 1>, scalar_prefetch = 0 : i64, scratch_operands = 3 : i64, tpu.core_type = #tpu.core_type<tc>, window_params = [{transform_indices = @transform_0, window_bounds = array<i64: 8, 128>}, {transform_indices = @transform_1, window_bounds = array<i64: 128, 128>}, {transform_indices = @transform_2, window_bounds = array<i64: 8, 1>}, {transform_indices = @transform_3, window_bounds = array<i64: 1, 128>}, {transform_indices = @transform_4, window_bounds = array<i64: 8, 1>}, {transform_indices = @transform_5, window_bounds = array<i64: 8, 1>}]} {
    %c0_i32 = arith.constant 0 : i32
    %0 = arith.cmpi eq, %arg1, %c0_i32 : i32
    %1 = arith.extui %0 : i1 to i32
    %c0_i32_0 = arith.constant 0 : i32
    %2 = arith.cmpi ne, %1, %c0_i32_0 : i32
    scf.if %2 {
      %cst_31 = arith.constant 0xFF800000 : f32
      %58 = vector.broadcast %cst_31 : f32 to vector<8x1xf32>
      %c0_32 = arith.constant 0 : index
      %c0_33 = arith.constant 0 : index
      %59 = vector.load %arg8[%c0_32, %c0_33] : memref<8x1xf32, #tpu.memory_space<vmem>>, vector<8x1xf32>
      tpu.vector_store %arg8[%c0_32, %c0_33], %58 {strides = array<i32>} : memref<8x1xf32, #tpu.memory_space<vmem>>, vector<8x1xf32>,
      %cst_34 = arith.constant 0.000000e+00 : f32
      %60 = vector.broadcast %cst_34 : f32 to vector<8x1xf32>
      %c0_35 = arith.constant 0 : index
      %c0_36 = arith.constant 0 : index
      %61 = vector.load %arg9[%c0_35, %c0_36] : memref<8x1xf32, #tpu.memory_space<vmem>>, vector<8x1xf32>
      tpu.vector_store %arg9[%c0_35, %c0_36], %60 {strides = array<i32>} : memref<8x1xf32, #tpu.memory_space<vmem>>, vector<8x1xf32>,
      %cst_37 = arith.constant 0.000000e+00 : f32
      %62 = vector.broadcast %cst_37 : f32 to vector<8x1xf32>
      %c0_38 = arith.constant 0 : index
      %c0_39 = arith.constant 0 : index
      %63 = vector.load %arg10[%c0_38, %c0_39] : memref<8x1xf32, #tpu.memory_space<vmem>>, vector<8x1xf32>
      tpu.vector_store %arg10[%c0_38, %c0_39], %62 {strides = array<i32>} : memref<8x1xf32, #tpu.memory_space<vmem>>, vector<8x1xf32>,
    } else {
    }
    %c0 = arith.constant 0 : index
    %c0_1 = arith.constant 0 : index
    %3 = vector.load %arg2[%c0, %c0_1] : memref<8x128xf32, #tpu.memory_space<vmem>>, vector<8x128xf32>
    %c0_2 = arith.constant 0 : index
    %c0_3 = arith.constant 0 : index
    %4 = vector.load %arg3[%c0_2, %c0_3] : memref<128x128xf32, #tpu.memory_space<vmem>>, vector<128x128xf32>
    %cst = arith.constant dense<0.000000e+00> : vector<8x128xf32>
    %5 = tpu.matmul %3, %4, %cst {dimension_numbers = #tpu.dot_dimension_numbers<[1], [1], [0], [0], [0, 0, 1, 0], [], []>} : vector<8x128xf32>, vector<128x128xf32>, vector<8x128xf32> -> vector<8x128xf32>
    %cst_4 = arith.constant 14.2857141 : f32
    %6 = vector.broadcast %cst_4 : f32 to vector<8x128xf32>
    %7 = arith.mulf %5, %6 : vector<8x128xf32>
    %c8_i32 = arith.constant 8 : i32
    %8 = arith.muli %arg0, %c8_i32 : i32
    %9 = tpu.iota {dimensions = array<i32: 0>} : vector<8x1xi32>
    %10 = vector.broadcast %8 : i32 to vector<8x1xi32>
    %11 = arith.addi %10, %9 : vector<8x1xi32>
    %c128_i32 = arith.constant 128 : i32
    %12 = arith.muli %arg1, %c128_i32 : i32
    %13 = tpu.iota {dimensions = array<i32: 1>} : vector<1x128xi32>
    %14 = vector.broadcast %12 : i32 to vector<1x128xi32>
    %15 = arith.addi %14, %13 : vector<1x128xi32>
    %16 = vector.broadcast %11 : vector<8x1xi32> to vector<8x128xi32>
    %17 = vector.broadcast %15 : vector<1x128xi32> to vector<8x128xi32>
    %18 = arith.cmpi ne, %16, %17 : vector<8x128xi32>
    %c8_i32_5 = arith.constant 8 : i32
    %19 = vector.broadcast %c8_i32_5 : i32 to vector<1x128xi32>
    %20 = arith.cmpi slt, %15, %19 : vector<1x128xi32>
    %21 = vector.broadcast %20 : vector<1x128xi1> to vector<8x128xi1>
    %22 = arith.andi %18, %21 : vector<8x128xi1>
    %cst_6 = arith.constant 0xFF800000 : f32
    %23 = vector.broadcast %cst_6 : f32 to vector<8x128xf32>
    %24 = arith.select %22, %7, %23 : vector<8x128xi1>, vector<8x128xf32>
    %c0_7 = arith.constant 0 : index
    %c0_8 = arith.constant 0 : index
    %25 = vector.load %arg8[%c0_7, %c0_8] : memref<8x1xf32, #tpu.memory_space<vmem>>, vector<8x1xf32>
    %cst_9 = arith.constant dense<0xFF800000> : vector<8xf32>
    %26 = vector.multi_reduction <maximumf>, %24, %cst_9 [1] : vector<8x128xf32> to vector<8xf32>
    %27 = vector.shape_cast %26 : vector<8xf32> to vector<8x1xf32>
    %28 = arith.maximumf %25, %27 : vector<8x1xf32>
    %c0_10 = arith.constant 0 : index
    %c0_11 = arith.constant 0 : index
    %29 = vector.load %arg8[%c0_10, %c0_11] : memref<8x1xf32, #tpu.memory_space<vmem>>, vector<8x1xf32>
    %30 = arith.subf %29, %28 : vector<8x1xf32>
    %31 = math.exp %30 : vector<8x1xf32>
    %32 = vector.broadcast %28 : vector<8x1xf32> to vector<8x128xf32>
    %33 = arith.subf %24, %32 : vector<8x128xf32>
    %34 = math.exp %33 : vector<8x128xf32>
    %c0_12 = arith.constant 0 : index
    %c0_13 = arith.constant 0 : index
    %35 = vector.load %arg9[%c0_12, %c0_13] : memref<8x1xf32, #tpu.memory_space<vmem>>, vector<8x1xf32>
    %36 = arith.mulf %31, %35 : vector<8x1xf32>
    %cst_14 = arith.constant dense<0.000000e+00> : vector<8xf32>
    %37 = vector.multi_reduction <add>, %34, %cst_14 [1] : vector<8x128xf32> to vector<8xf32>
    %38 = vector.shape_cast %37 : vector<8xf32> to vector<8x1xf32>
    %39 = arith.addf %36, %38 : vector<8x1xf32>
    %c0_15 = arith.constant 0 : index
    %c0_16 = arith.constant 0 : index
    %40 = vector.load %arg9[%c0_15, %c0_16] : memref<8x1xf32, #tpu.memory_space<vmem>>, vector<8x1xf32>
    tpu.vector_store %arg9[%c0_15, %c0_16], %39 {strides = array<i32>} : memref<8x1xf32, #tpu.memory_space<vmem>>, vector<8x1xf32>,
    %c0_17 = arith.constant 0 : index
    %c0_18 = arith.constant 0 : index
    %41 = vector.load %arg8[%c0_17, %c0_18] : memref<8x1xf32, #tpu.memory_space<vmem>>, vector<8x1xf32>
    tpu.vector_store %arg8[%c0_17, %c0_18], %28 {strides = array<i32>} : memref<8x1xf32, #tpu.memory_space<vmem>>, vector<8x1xf32>,
    %c0_19 = arith.constant 0 : index
    %c0_20 = arith.constant 0 : index
    %42 = vector.load %arg4[%c0_19, %c0_20] : memref<8x1xi32, #tpu.memory_space<vmem>>, vector<8x1xi32>
    %c0_21 = arith.constant 0 : index
    %c0_22 = arith.constant 0 : index
    %43 = vector.load %arg5[%c0_21, %c0_22] : memref<1x128xi32, #tpu.memory_space<vmem>>, vector<1x128xi32>
    %44 = vector.broadcast %42 : vector<8x1xi32> to vector<8x128xi32>
    %45 = vector.broadcast %43 : vector<1x128xi32> to vector<8x128xi32>
    %46 = arith.cmpi eq, %44, %45 : vector<8x128xi32>
    %47 = arith.andi %22, %46 : vector<8x128xi1>
    %c0_23 = arith.constant 0 : index
    %c0_24 = arith.constant 0 : index
    %48 = vector.load %arg10[%c0_23, %c0_24] : memref<8x1xf32, #tpu.memory_space<vmem>>, vector<8x1xf32>
    %cst_25 = arith.constant 0.000000e+00 : f32
    %49 = vector.broadcast %cst_25 : f32 to vector<8x128xf32>
    %50 = arith.select %47, %7, %49 : vector<8x128xi1>, vector<8x128xf32>
    %cst_26 = arith.constant dense<0.000000e+00> : vector<8xf32>
    %51 = vector.multi_reduction <add>, %50, %cst_26 [1] : vector<8x128xf32> to vector<8xf32>
    %52 = vector.shape_cast %51 : vector<8xf32> to vector<8x1xf32>
    %53 = arith.addf %48, %52 : vector<8x1xf32>
    %c0_27 = arith.constant 0 : index
    %c0_28 = arith.constant 0 : index
    %54 = vector.load %arg10[%c0_27, %c0_28] : memref<8x1xf32, #tpu.memory_space<vmem>>, vector<8x1xf32>
    tpu.vector_store %arg10[%c0_27, %c0_28], %53 {strides = array<i32>} : memref<8x1xf32, #tpu.memory_space<vmem>>, vector<8x1xf32>,
    %c0_i32_29 = arith.constant 0 : i32
    %55 = arith.cmpi eq, %arg1, %c0_i32_29 : i32
    %56 = arith.extui %55 : i1 to i32
    %c0_i32_30 = arith.constant 0 : i32
    %57 = arith.cmpi ne, %56, %c0_i32_30 : i32
    scf.if %57 {
      %c0_31 = arith.constant 0 : index
      %c0_32 = arith.constant 0 : index
      %58 = vector.load %arg6[%c0_31, %c0_32] : memref<8x1xf32, #tpu.memory_space<vmem>>, vector<8x1xf32>
      %c0_33 = arith.constant 0 : index
      %c0_34 = arith.constant 0 : index
      %59 = vector.load %arg8[%c0_33, %c0_34] : memref<8x1xf32, #tpu.memory_space<vmem>>, vector<8x1xf32>
      %c0_35 = arith.constant 0 : index
      %c0_36 = arith.constant 0 : index
      %60 = vector.load %arg9[%c0_35, %c0_36] : memref<8x1xf32, #tpu.memory_space<vmem>>, vector<8x1xf32>
      %cst_37 = arith.constant 9.99999996E-13 : f32
      %61 = vector.broadcast %cst_37 : f32 to vector<8x1xf32>
      %62 = arith.maximumf %60, %61 : vector<8x1xf32>
      %63 = math.log %62 : vector<8x1xf32>
      %64 = arith.addf %59, %63 : vector<8x1xf32>
      %c0_38 = arith.constant 0 : index
      %c0_39 = arith.constant 0 : index
      %65 = vector.load %arg10[%c0_38, %c0_39] : memref<8x1xf32, #tpu.memory_space<vmem>>, vector<8x1xf32>
      %66 = arith.mulf %58, %64 : vector<8x1xf32>
      %67 = arith.subf %65, %66 : vector<8x1xf32>
      %cst_40 = arith.constant 0.000000e+00 : f32
      %68 = vector.broadcast %cst_40 : f32 to vector<8x1xf32>
      %69 = arith.cmpf ogt, %58, %68 : vector<8x1xf32>
      %cst_41 = arith.constant 1.000000e+00 : f32
      %70 = vector.broadcast %cst_41 : f32 to vector<8x1xf32>
      %71 = arith.maximumf %58, %70 : vector<8x1xf32>
      %72 = arith.divf %67, %71 : vector<8x1xf32>
      %cst_42 = arith.constant 0.000000e+00 : f32
      %73 = vector.broadcast %cst_42 : f32 to vector<8x1xf32>
      %74 = arith.select %69, %72, %73 : vector<8x1xi1>, vector<8x1xf32>
      %c0_43 = arith.constant 0 : index
      %c0_44 = arith.constant 0 : index
      %75 = vector.load %arg7[%c0_43, %c0_44] : memref<8x1xf32, #tpu.memory_space<vmem>>, vector<8x1xf32>
      tpu.vector_store %arg7[%c0_43, %c0_44], %74 {strides = array<i32>} : memref<8x1xf32, #tpu.memory_space<vmem>>, vector<8x1xf32>,
    } else {
    }
    return
  }
  func.func @transform_0(%arg0: i32, %arg1: i32) -> (i32, i32) {
    %c0_i32 = arith.constant 0 : i32
    %c0_i32_0 = arith.constant 0 : i32
    return %arg0, %c0_i32 : i32, i32
  }
  func.func @transform_1(%arg0: i32, %arg1: i32) -> (i32, i32) {
    %c0_i32 = arith.constant 0 : i32
    %c0_i32_0 = arith.constant 0 : i32
    return %arg1, %c0_i32 : i32, i32
  }
  func.func @transform_2(%arg0: i32, %arg1: i32) -> (i32, i32) {
    %c0_i32 = arith.constant 0 : i32
    %c0_i32_0 = arith.constant 0 : i32
    return %arg0, %c0_i32 : i32, i32
  }
  func.func @transform_3(%arg0: i32, %arg1: i32) -> (i32, i32) {
    %c0_i32 = arith.constant 0 : i32
    %c0_i32_0 = arith.constant 0 : i32
    return %c0_i32, %arg1 : i32, i32
  }
  func.func @transform_4(%arg0: i32, %arg1: i32) -> (i32, i32) {
    %c0_i32 = arith.constant 0 : i32
    %c0_i32_0 = arith.constant 0 : i32
    return %arg0, %c0_i32 : i32, i32
  }
  func.func @transform_5(%arg0: i32, %arg1: i32) -> (i32, i32) {
    %c0_i32 = arith.constant 0 : i32
    %c0_i32_0 = arith.constant 0 : i32
    return %arg0, %c0_i32 : i32, i32
  }
}

</mosaic_0001>

<llo_original>
// kernel: tpu_custom_call.1
$region0: #{tpu_custom_call.1}
  #allocation0 [shape = 'u32[]', space=smem, size = 0x4, offset = 0x4, fixed_abs, tag = 'smem constant byte address 0x4 - core index']
  #allocation1 [shape = 'u32[72,128]{1,0:T(1,128)}', space=vmem, size = 0x9000, scoped, tag = 'internal scratch']
  #allocation2 [shape = 'f32[8,1]{1,0:T(8,128)}', space=vmem, size = 0x1000, scoped, tag = 'scratch operand']
  #allocation3 [shape = 'f32[8,1]{1,0:T(8,128)}', space=vmem, size = 0x1000, scoped, tag = 'scratch operand']
  #allocation4 [shape = 'f32[8,1]{1,0:T(8,128)}', space=vmem, size = 0x1000, scoped, tag = 'scratch operand']
  %s0 = inlined_call_operand.vmem [shape: f32[8,128], index: 0, kind: input, shape index: {}]
  %s1 = inlined_call_operand.hbm [shape: f32[128,128], index: 1, kind: input, shape index: {}]
  %s2 = inlined_call_operand.vmem [shape: s32[8,1], index: 2, kind: input, shape index: {}]
  %s3 = inlined_call_operand.vmem [shape: s32[1,128], index: 3, kind: input, shape index: {}]
  %s4 = inlined_call_operand.vmem [shape: f32[8,1], index: 4, kind: input, shape index: {}]
  %s5 = inlined_call_operand.vmem [shape: f32[8,1], index: 5, kind: output, shape index: {}]
  %s6 = sld [smem:[#allocation0]]
  $region42: #{tpu_custom_call.1} parent=0
    _
  %s8 = ssub.s32 1, %s6
  %s9 = scalar_select 0, %s8, %s6
  $region1: #{tpu_custom_call.1} parent=0
    #allocation5 [shape = 'u8[65536]{0}', space=vmem, size = 0x10000, scoped, tag = 'input window, operand 1, single buffered']
    #allocation6 [shape = 's32[1]{0}', space=sflag, size = 0x4, scoped, tag = 'scoped memory for tpu_custom_call.1']
    %10 = vsyncpa [#allocation6], 0
    // Predicated region
    $region2: #{tpu_custom_call.1} parent=1 // pred_check
      _
    $region3: #{tpu_custom_call.1} parent=1 // pred_check_branch
      %12 = sbr.rel (0) target = $region5
    $region4: #{tpu_custom_call.1} parent=1 // pred_region
      _
    $region5: #{tpu_custom_call.1} parent=1 // pred_fallthru
      _
    // Predicated region
    $region6: #{tpu_custom_call.1} parent=1 // pred_check
      _
    $region7: #{tpu_custom_call.1} parent=1 // pred_check_branch
      %14 = sbr.rel (0) target = $region9
    $region8: #{tpu_custom_call.1} parent=1 // pred_region
      %16 = vsyncadd [#allocation6], 0
      %s17 = sshll.u32 %s1, 4
      %s18 = int_to_ptr.hbm [resolvable:$true] %s17
      %s19 = sshll.u32 [#allocation5], 4
      %s20 = int_to_ptr.vmem [resolvable:$true] %s19
      %25 = dma.hbm_to_vmem [thread:$0]  %s18, 2048, %s20, [#allocation6], 128, 128, 8
    $region9: #{tpu_custom_call.1} parent=1 // pred_fallthru
      _
    // Predicated region
    $region10: #{tpu_custom_call.1} parent=1 // pred_check
      _
    $region11: #{tpu_custom_call.1} parent=1 // pred_check_branch
      %27 = sbr.rel (0) target = $region13
    $region12: #{tpu_custom_call.1} parent=1 // pred_region
      _
    $region13: #{tpu_custom_call.1} parent=1 // pred_fallthru
      _
    // Predicated region
    $region14: #{tpu_custom_call.1} parent=1 // pred_check
      _
    $region15: #{tpu_custom_call.1} parent=1 // pred_check_branch
      %29 = sbr.rel (0) target = $region17
    $region16: #{tpu_custom_call.1} parent=1 // pred_region
      _
    $region17: #{tpu_custom_call.1} parent=1 // pred_fallthru
      _
    // Predicated region
    $region18: #{tpu_custom_call.1} parent=1 // pred_check
      _
    $region19: #{tpu_custom_call.1} parent=1 // pred_check_branch
      %31 = sbr.rel (0) target = $region21
    $region20: #{tpu_custom_call.1} parent=1 // pred_region
      _
    $region21: #{tpu_custom_call.1} parent=1 // pred_fallthru
      _
    // Predicated region
    $region22: #{tpu_custom_call.1} parent=1 // pred_check
      _
    $region23: #{tpu_custom_call.1} parent=1 // pred_check_branch
      %33 = sbr.rel (0) target = $region25
    $region24: #{tpu_custom_call.1} parent=1 // pred_region
      %35 = dma.done [#allocation6], 2048
    $region25: #{tpu_custom_call.1} parent=1 // pred_fallthru
      _
    %p36 = scmp.eq.s32.totalorder 0, 0
    // Predicated region
    $region26: #{tpu_custom_call.1} parent=1 // pred_check
      %p37 = pneg %p36
    $region27: #{tpu_custom_call.1} parent=1 // pred_check_branch
      %39 = sbr.rel (%p37) target = $region29
    $region28: #{tpu_custom_call.1} parent=1 // pred_region
      %vm40 = vcmask 7168
      %41 = vst.msk [vmem:[#allocation2] sm:$0xff] %vm40, -inf
      %42 = vst.msk [vmem:[#allocation3] sm:$0xff] %vm40, 0.0
      %43 = vst.msk [vmem:[#allocation4] sm:$0xff] %vm40, 0.0
    $region29: #{tpu_custom_call.1} parent=1 // pred_fallthru
      _
    %v44 = vld [vmem:[%s0] sm:$0xff]
    %v45 = vld [vmem:[#allocation5] sm:$0xff]
    %v46 = vld [vmem:[#allocation5 + $0x8] sm:$0xff]
    %v47 = vld [vmem:[#allocation5 + $0x10] sm:$0xff]
    %v48 = vld [vmem:[#allocation5 + $0x18] sm:$0xff]
    %v49 = vld [vmem:[#allocation5 + $0x20] sm:$0xff]
    %v50 = vld [vmem:[#allocation5 + $0x28] sm:$0xff]
    %v51 = vld [vmem:[#allocation5 + $0x30] sm:$0xff]
    %v52 = vld [vmem:[#allocation5 + $0x38] sm:$0xff]
    %v53 = vld [vmem:[#allocation5 + $0x40] sm:$0xff]
    %v54 = vld [vmem:[#allocation5 + $0x48] sm:$0xff]
    %v55 = vld [vmem:[#allocation5 + $0x50] sm:$0xff]
    %v56 = vld [vmem:[#allocation5 + $0x58] sm:$0xff]
    %v57 = vld [vmem:[#allocation5 + $0x60] sm:$0xff]
    %v58 = vld [vmem:[#allocation5 + $0x68] sm:$0xff]
    %v59 = vld [vmem:[#allocation5 + $0x70] sm:$0xff]
    %v60 = vld [vmem:[#allocation5 + $0x78] sm:$0xff]
    %61 = vmatpush.xpose.msra.mxu0 %v60
    %62 = vmatpush.xpose.msra.mxu0 %v59
    %63 = vmatpush.xpose.msra.mxu0 %v58
    %64 = vmatpush.xpose.msra.mxu0 %v57
    %65 = vmatpush.xpose.msra.mxu0 %v56
    %66 = vmatpush.xpose.msra.mxu0 %v55
    %67 = vmatpush.xpose.msra.mxu0 %v54
    %68 = vmatpush.xpose.msra.mxu0 %v53
    %69 = vmatpush.xpose.msra.mxu0 %v52
    %70 = vmatpush.xpose.msra.mxu0 %v51
    %71 = vmatpush.xpose.msra.mxu0 %v50
    %72 = vmatpush.xpose.msra.mxu0 %v49
    %73 = vmatpush.xpose.msra.mxu0 %v48
    %74 = vmatpush.xpose.msra.mxu0 %v47
    %75 = vmatpush.xpose.msra.mxu0 %v46
    %76 = vmatpush.xpose.msra.mxu0 %v45
    %77 = vmatmul.f32.gmra.mxu0 %v44
    %v78 = vpop.f32.mrf.mxu0
    %v79 = vadd.f32 0.0, %v78
    %80 = vdwg.mxu0
    %v81 = vmul.f32 %v79, 14.285714
    %s82 = smul.u32 0, 8
    %v83 = vlaneseq
    %v84 = vshrl.u32 %v83, 7
    %v85 = vstv %s82
    %v86 = vadd.s32 %v85, %v84
    %s87 = smul.u32 0, 128
    %v88 = vlaneseq
    %v89 = vand.u32 %v88, 127
    %v90 = vstv %s87
    %v91 = vadd.s32 %v90, %v89
    %vm92 = vcmp.ne.s32.totalorder %v86, %v91
    %vm93 = vcmp.lt.s32.totalorder %v91, 8
    %v94 = vsel %vm93, 1, 0
    %vm95 = vcmp.eq.s32.totalorder %v94, 1
    %vm96 = vmand %vm92, %vm95
    %v97 = vsel %vm96, %v81, -inf
    %v98 = vld [vmem:[#allocation2] sm:$0xff]
    %99 = vmax.xlane.f32.xlu0 %v97
    %v100 = vpop.xlane.xlu0 %99
    %v101 = vmax.f32 %v98, %v100
    %v102 = vsub.f32 %v98, %v101
    %v103 = vmul.f32 %v102, 1.442695
    %v104 = vpow.pop %v103
    %106 = vset.pattern.permute.xlu0 0
    %107 = vperm.xlu0 %106, %v101
    %v108 = vpop.permute.xlu0 %107
    %v110 = vsub.f32 %v97, %v108
    %v111 = vmul.f32 %v110, 1.442695
    %v112 = vpow.pop %v111
    %v113 = vld [vmem:[#allocation3] sm:$0xff]
    %v114 = vmul.f32 %v104, %v113
    %115 = vadd.xlane.f32.xlu0 %v112
    %v116 = vpop.xlane.xlu0 %115
    %v117 = vadd.f32 %v114, %v116
    %vm118 = vcmask 7168
    %119 = vst.msk [vmem:[#allocation3] sm:$0xff] %vm118, %v117
    %120 = vst.msk [vmem:[#allocation2] sm:$0xff] %vm118, %v101
    %v121 = vld [vmem:[%s2] sm:$0xff]
    %v122 = vld [vmem:[%s3] sm:$0x1]
    %123 = vset.pattern.permute.xlu0 0
    %124 = vperm.xlu0 %123, %v121
    %v125 = vpop.permute.xlu0 %124
    %v126 = vperm.slane %v122, 0
    %vm127 = vcmp.eq.s32.totalorder %v125, %v126
    %vm128 = vmand %vm96, %vm127
    %v129 = vld [vmem:[#allocation4] sm:$0xff]
    %v130 = vsel %vm128, %v81, 0.0
    %131 = vadd.xlane.f32.xlu0 %v130
    %v132 = vpop.xlane.xlu0 %131
    %v133 = vadd.f32 %v129, %v132
    %134 = vst.msk [vmem:[#allocation4] sm:$0xff] %vm118, %v133
    // Predicated region
    $region30: #{tpu_custom_call.1} parent=1 // pred_check
      %p135 = pneg %p36
    $region31: #{tpu_custom_call.1} parent=1 // pred_check_branch
      %137 = sbr.rel (%p135) target = $region33
    $region32: #{tpu_custom_call.1} parent=1 // pred_region
      %v138 = vld [vmem:[%s4] sm:$0xff]
      %v139 = vld [vmem:[#allocation2] sm:$0xff]
      %v140 = vld [vmem:[#allocation3] sm:$0xff]
      %v141 = vmax.f32 %v140, 1e-12
      %v142 = vlog2.pop %v141
      %v143 = vmul.f32 %v142, 0.6931472
      %v144 = vadd.f32 %v139, %v143
      %v145 = vld [vmem:[#allocation4] sm:$0xff]
      %v146 = vmul.f32 %v138, %v144
      %v147 = vsub.f32 %v145, %v146
      %vm148 = vcmp.gt.f32.partialorder %v138, 0.0
      %v149 = vmax.f32 %v138, 1.0
      %v150 = vrcp.pop %v149
      %v151 = vmul.f32 %v149, %v150
      %v152 = vsub.f32 1.0, %v151
      %v153 = vmul.f32 %v150, %v152
      %v154 = vadd.f32 %v150, %v153
      %vm155 = vweird.f32 %v149
      %vm156 = vweird.f32 %v150
      %vm157 = vmor %vm155, %vm156
      %v158 = vsel %vm157, %v150, %v154
      %v159 = vand.u32 2147483647, %v149
      %vm160 = vcmp.eq.f32.partialorder %v159, 8.507059e+37
      %v161 = vand.u32 %v149, 2147483648
      %v162 = vor.u32 1.1754944e-38, %v161
      %v163 = vsel %vm160, %v162, %v158
      %v164 = vmul.f32 %v147, %v163
      %v165 = vsel %vm148, %v164, 0.0
      %166 = vst.msk [vmem:[%s5] sm:$0xff] %vm118, %v165
    $region33: #{tpu_custom_call.1} parent=1 // pred_fallthru
      _
    // Predicated region
    $region34: #{tpu_custom_call.1} parent=1 // pred_check
      _
    $region35: #{tpu_custom_call.1} parent=1 // pred_check_branch
      %168 = sbr.rel (0) target = $region37
    $region36: #{tpu_custom_call.1} parent=1 // pred_region
      _
    $region37: #{tpu_custom_call.1} parent=1 // pred_fallthru
      _
    // Predicated region
    $region38: #{tpu_custom_call.1} parent=1 // pred_check
      _
    $region39: #{tpu_custom_call.1} parent=1 // pred_check_branch
      %170 = sbr.rel (0) target = $region41
    $region40: #{tpu_custom_call.1} parent=1 // pred_region
      _
    $region41: #{tpu_custom_call.1} parent=1 // pred_fallthru
      _
    %171 = vsyncpa [#allocation6], 1

</llo_original>
